<compile_context>
chip_gen: v7x
topology: tpu7x:2x2x1
jax: 0.10.0
libtpu: 0.0.40
codegen_flags: <defaults>
</compile_context>

<pallas_src>
import jax
import jax.numpy as jnp
from jax.experimental import pallas as pl
from jax.experimental.pallas import tpu as pltpu


def _softplus(x):
    # Single-branch numerically stable softplus: 1x exp + 1x log1p on the EUP.
    # (The jnp.where form evaluates both branches -> 2x the EUP work.)
    return jnp.maximum(x, 0.0) + jnp.log1p(jnp.exp(-jnp.abs(x)))


def conditional_layer_kernel(x_ref, cond_ref, w_ref, o_ref):
    f = x_ref.shape[-1]
    cond = cond_ref[...].astype(jnp.float32)
    w = w_ref[...].astype(jnp.float32)

    # One fused (TB, C) @ (C, 2F) MXU matmul, f32 accumulation.
    fused = jnp.dot(cond, w, preferred_element_type=jnp.float32)
    pre_scale = fused[:, :f]          # slices at lane-aligned (multiple of 128) offset
    bias = fused[:, f:]
    scale = _softplus(pre_scale)

    x = x_ref[...]
    if x.dtype == jnp.bfloat16:
        # bf16 VALU FMA (v6e/v7x): cast scale/bias down once, avoid per-element
        # upcast of the (large) activation tile.
        o_ref[...] = (scale.astype(jnp.bfloat16) * x
                      + bias.astype(jnp.bfloat16)).astype(o_ref.dtype)
    else:
        # For f32 inputs the astype is a trace-time no-op.
        o_ref[...] = (scale * x.astype(jnp.float32) + bias).astype(o_ref.dtype)


def conditional_layer(inputs, condition, w_scale, w_bias):
    """inputs: (B, F), condition: (B, C), w_scale/w_bias: (F, C) PyTorch layout."""
    B, F = inputs.shape
    Bc, C = condition.shape
    assert Bc == B
    out_dtype = inputs.dtype

    # --- Pad F to a multiple of 128 so output stores are lane-dense (unmasked vst).
    F_pad = ((F + 127) // 128) * 128
    if F_pad != F:
        inputs = jnp.pad(inputs, ((0, 0), (0, F_pad - F)))
        w_scale = jnp.pad(w_scale, ((0, F_pad - F), (0, 0)))
        w_bias = jnp.pad(w_bias, ((0, F_pad - F), (0, 0)))

    # --- Fuse the two K=C matmuls into one: (C, 2*F_pad).
    w_cat = jnp.concatenate([w_scale, w_bias], axis=0).T

    # --- Tile the batch axis. Target ~2 MiB per activation buffer so
    # double-buffered in + out + cond + resident weights fit comfortably within
    # the default scoped-VMEM limit on every chip (16 MiB v5e, 32 MiB v6e/v7x;
    # v7x has only 64 MiB physical VMEM).
    itemsize = jnp.dtype(out_dtype).itemsize
    row_mult = 16 if itemsize < 4 else 8          # sublane packing (bf16 vs f32)
    target_bytes = 2 * 1024 * 1024
    max_rows = max(row_mult, target_bytes // (F_pad * itemsize))
    TB = min(B, max_rows)
    TB = max(row_mult, (TB // row_mult) * row_mult)

    B_pad = ((B + TB - 1) // TB) * TB
    if B_pad != B:
        inputs = jnp.pad(inputs, ((0, B_pad - B), (0, 0)))
        condition = jnp.pad(condition, ((0, B_pad - B), (0, 0)))

    grid = (B_pad // TB,)

    out = pl.pallas_call(
        conditional_layer_kernel,
        out_shape=jax.ShapeDtypeStruct((B_pad, F_pad), out_dtype),
        grid_spec=pltpu.PrefetchScalarGridSpec(
            num_scalar_prefetch=0,
            grid=grid,
            in_specs=[
                pl.BlockSpec((TB, F_pad), lambda i: (i, 0)),       # activations
                pl.BlockSpec((TB, C), lambda i: (i, 0)),           # condition
                pl.BlockSpec((C, 2 * F_pad), lambda i: (0, 0)),    # fused weights (resident)
            ],
            out_specs=pl.BlockSpec((TB, F_pad), lambda i: (i, 0)),
        ),
        compiler_params=pltpu.CompilerParams(
            # Independent batch tiles: shard across the 2 TensorCores on v7x.
            dimension_semantics=("parallel",),
        ),
    )(inputs, condition, w_cat)

    if B_pad != B or F_pad != F:
        out = out[:B, :F]
    return out


if __name__ == "__main__":
    B, F, C = 8, 128, 32  # batch, num_features (out_channels), num_condition (lmda_depth)

    key = jax.random.PRNGKey(0)
    k_x, k_c, k_ws, k_wb = jax.random.split(key, 4)

    inputs = jax.random.normal(k_x, (B, F), dtype=jnp.float32)
    condition = jax.random.normal(k_c, (B, C), dtype=jnp.float32)

    # Deterministic Linear(bias=False) init, PyTorch-style U(-1/sqrt(C), 1/sqrt(C))
    bound = 1.0 / jnp.sqrt(jnp.float32(C))
    w_scale = jax.random.uniform(k_ws, (F, C), jnp.float32, -bound, bound)
    w_bias = jax.random.uniform(k_wb, (F, C), jnp.float32, -bound, bound)

    out = conditional_layer(inputs, condition, w_scale, w_bias)
    out = jax.block_until_ready(out)

    # Pure-JAX reference check (same math path as PyTorch)
    ref = jax.nn.softplus(condition @ w_scale.T) * inputs + condition @ w_bias.T
    assert out.shape == (B, F)
    assert jnp.allclose(out, ref, atol=1e-5, rtol=1e-5)

    print("KERNEL_OK")
</pallas_src>

<mosaic_0001>
module attributes {stable_mosaic.version = 11 : i64} {
  func.func @conditional_layer_kernel(%arg0: i32, %arg1: memref<8x128xf32, #tpu.memory_space<vmem>>, %arg2: memref<8x32xf32, #tpu.memory_space<vmem>>, %arg3: memref<32x256xf32, #tpu.memory_space<vmem>>, %arg4: memref<8x128xf32, #tpu.memory_space<vmem>>) attributes {dimension_semantics = [#tpu.dimension_semantics<parallel>], iteration_bounds = array<i64: 1>, scalar_prefetch = 0 : i64, scratch_operands = 0 : i64, tpu.core_type = #tpu.core_type<tc>, window_params = [{transform_indices = @transform_0, window_bounds = array<i64: 8, 128>}, {transform_indices = @transform_1, window_bounds = array<i64: 8, 32>}, {pipeline_mode = #tpu.pipeline_mode<synchronous>, transform_indices = @transform_2, window_bounds = array<i64: 32, 256>}, {transform_indices = @transform_3, window_bounds = array<i64: 8, 128>}]} {
    %c0 = arith.constant 0 : index
    %c0_0 = arith.constant 0 : index
    %0 = vector.load %arg2[%c0, %c0_0] : memref<8x32xf32, #tpu.memory_space<vmem>>, vector<8x32xf32>
    %c0_1 = arith.constant 0 : index
    %c0_2 = arith.constant 0 : index
    %1 = vector.load %arg3[%c0_1, %c0_2] : memref<32x256xf32, #tpu.memory_space<vmem>>, vector<32x256xf32>
    %cst = arith.constant dense<0.000000e+00> : vector<8x256xf32>
    %2 = tpu.matmul %0, %1, %cst {dimension_numbers = #tpu.dot_dimension_numbers<[1], [0], [0], [1], [0, 0, 1, 1], [], []>} : vector<8x32xf32>, vector<32x256xf32>, vector<8x256xf32> -> vector<8x256xf32>
    %3 = vector.extract_strided_slice %2 {offsets = [0, 0], sizes = [8, 128], strides = [1, 1]} : vector<8x256xf32> to vector<8x128xf32>
    %4 = vector.extract_strided_slice %2 {offsets = [0, 128], sizes = [8, 128], strides = [1, 1]} : vector<8x256xf32> to vector<8x128xf32>
    %cst_3 = arith.constant 0.000000e+00 : f32
    %5 = vector.broadcast %cst_3 : f32 to vector<8x128xf32>
    %6 = arith.maximumf %3, %5 : vector<8x128xf32>
    %7 = math.absf %3 : vector<8x128xf32>
    %cst_4 = arith.constant 0.000000e+00 : f32
    %8 = vector.broadcast %cst_4 : f32 to vector<8x128xf32>
    %9 = arith.subf %8, %7 : vector<8x128xf32>
    %10 = math.exp %9 : vector<8x128xf32>
    %11 = math.log1p %10 : vector<8x128xf32>
    %12 = arith.addf %6, %11 : vector<8x128xf32>
    %c0_5 = arith.constant 0 : index
    %c0_6 = arith.constant 0 : index
    %13 = vector.load %arg1[%c0_5, %c0_6] : memref<8x128xf32, #tpu.memory_space<vmem>>, vector<8x128xf32>
    %14 = arith.mulf %12, %13 : vector<8x128xf32>
    %15 = arith.addf %14, %4 : vector<8x128xf32>
    %c0_7 = arith.constant 0 : index
    %c0_8 = arith.constant 0 : index
    %16 = vector.load %arg4[%c0_7, %c0_8] : memref<8x128xf32, #tpu.memory_space<vmem>>, vector<8x128xf32>
    tpu.vector_store %arg4[%c0_7, %c0_8], %15 {strides = array<i32>} : memref<8x128xf32, #tpu.memory_space<vmem>>, vector<8x128xf32>,
    return
  }
  func.func @transform_0(%arg0: i32) -> (i32, i32) {
    %c0_i32 = arith.constant 0 : i32
    %c0_i32_0 = arith.constant 0 : i32
    return %arg0, %c0_i32 : i32, i32
  }
  func.func @transform_1(%arg0: i32) -> (i32, i32) {
    %c0_i32 = arith.constant 0 : i32
    %c0_i32_0 = arith.constant 0 : i32
    return %arg0, %c0_i32 : i32, i32
  }
  func.func @transform_2(%arg0: i32) -> (i32, i32) {
    %c0_i32 = arith.constant 0 : i32
    %c0_i32_0 = arith.constant 0 : i32
    %c0_i32_1 = arith.constant 0 : i32
    return %c0_i32, %c0_i32_0 : i32, i32
  }
  func.func @transform_3(%arg0: i32) -> (i32, i32) {
    %c0_i32 = arith.constant 0 : i32
    %c0_i32_0 = arith.constant 0 : i32
    return %arg0, %c0_i32 : i32, i32
  }
}

</mosaic_0001>

<llo_original>
// kernel: tpu_custom_call.1
$region0: #{tpu_custom_call.1}
  #allocation0 [shape = 'u32[]', space=smem, size = 0x4, offset = 0x4, fixed_abs, tag = 'smem constant byte address 0x4 - core index']
  #allocation1 [shape = 'u32[144,128]{1,0:T(1,128)}', space=vmem, size = 0x12000, scoped, tag = 'internal scratch']
  %s0 = inlined_call_operand.hbm [shape: f32[8,128], index: 0, kind: input, shape index: {}]
  %s1 = inlined_call_operand.hbm [shape: f32[8,32], index: 1, kind: input, shape index: {}]
  %s2 = inlined_call_operand.hbm [shape: f32[32,256], index: 2, kind: input, shape index: {}]
  %s3 = inlined_call_operand.hbm [shape: f32[8,128], index: 3, kind: output, shape index: {}]
  %s4 = sld [smem:[#allocation0]]
  $region34: #{tpu_custom_call.1} parent=0
    _
  %s6 = ssub.s32 1, %s4
  %s7 = scalar_select 0, %s6, %s4
  $region1: #{tpu_custom_call.1} parent=0
    #allocation2 [shape = 'u8[4096]{0}', space=vmem, size = 0x1000, scoped, tag = 'input window, operand 0, single buffered']
    #allocation3 [shape = 's32[1]{0}', space=sflag, size = 0x4, scoped, tag = 'scoped memory for tpu_custom_call.1']
    #allocation4 [shape = 's32[1]{0}', space=sflag, size = 0x4, scoped, tag = 'scoped memory for tpu_custom_call.1']
    #allocation5 [shape = 'u8[4096]{0}', space=vmem, size = 0x1000, scoped, tag = 'input window, operand 1, single buffered']
    #allocation6 [shape = 's32[1]{0}', space=sflag, size = 0x4, scoped, tag = 'scoped memory for tpu_custom_call.1']
    #allocation7 [shape = 'u8[32768]{0}', space=vmem, size = 0x8000, scoped, tag = 'input window, operand 2, single buffered']
    #allocation8 [shape = 'u8[4096]{0}', space=vmem, size = 0x1000, scoped, tag = 'output window, operand 0, single buffered']
    %8 = vsyncpa [#allocation3], 0
    %9 = vsyncpa [#allocation6], 0
    %10 = vsyncpa [#allocation4], 0
    // Predicated region
    $region2: #{tpu_custom_call.1} parent=1 // pred_check
      _
    $region3: #{tpu_custom_call.1} parent=1 // pred_check_branch
      %12 = sbr.rel (0) target = $region5
    $region4: #{tpu_custom_call.1} parent=1 // pred_region
      %s14 = ssub.s32 128, 128
      %15 = vsyncadd [#allocation3], %s14
      %s17 = sshll.u32 [#allocation2], 4
      %s18 = int_to_ptr.vmem [resolvable:$true] %s17
      %20 = dma.hbm_to_vmem [thread:$0]  %s0, 128, %s18, [#allocation3]
    $region5: #{tpu_custom_call.1} parent=1 // pred_fallthru
      _
    // Predicated region
    $region6: #{tpu_custom_call.1} parent=1 // pred_check
      _
    $region7: #{tpu_custom_call.1} parent=1 // pred_check_branch
      %22 = sbr.rel (0) target = $region9
    $region8: #{tpu_custom_call.1} parent=1 // pred_region
      %s24 = ssub.s32 128, 128
      %25 = vsyncadd [#allocation6], %s24
      %s27 = sshll.u32 [#allocation5], 4
      %s28 = int_to_ptr.vmem [resolvable:$true] %s27
      %30 = dma.hbm_to_vmem [thread:$0]  %s1, 128, %s28, [#allocation6]
    $region9: #{tpu_custom_call.1} parent=1 // pred_fallthru
      _
    // Predicated region
    $region10: #{tpu_custom_call.1} parent=1 // pred_check
      _
    $region11: #{tpu_custom_call.1} parent=1 // pred_check_branch
      %32 = sbr.rel (0) target = $region13
    $region12: #{tpu_custom_call.1} parent=1 // pred_region
      %s34 = ssub.s32 1024, 1024
      %35 = vsyncadd [#allocation6], %s34
      %s36 = sshll.u32 [#allocation7], 4
      %s37 = int_to_ptr.vmem [resolvable:$true] %s36
      %42 = dma.hbm_to_vmem [thread:$0]  %s2, 1024, %s37, [#allocation6], 256, 256, 16
    $region13: #{tpu_custom_call.1} parent=1 // pred_fallthru
      _
    // Predicated region
    $region14: #{tpu_custom_call.1} parent=1 // pred_check
      _
    $region15: #{tpu_custom_call.1} parent=1 // pred_check_branch
      %44 = sbr.rel (0) target = $region17
    $region16: #{tpu_custom_call.1} parent=1 // pred_region
      %45 = dma.done [#allocation3], 128
    $region17: #{tpu_custom_call.1} parent=1 // pred_fallthru
      _
    // Predicated region
    $region18: #{tpu_custom_call.1} parent=1 // pred_check
      _
    $region19: #{tpu_custom_call.1} parent=1 // pred_check_branch
      %47 = sbr.rel (0) target = $region21
    $region20: #{tpu_custom_call.1} parent=1 // pred_region
      %48 = dma.done [#allocation6], 128
    $region21: #{tpu_custom_call.1} parent=1 // pred_fallthru
      _
    // Predicated region
    $region22: #{tpu_custom_call.1} parent=1 // pred_check
      _
    $region23: #{tpu_custom_call.1} parent=1 // pred_check_branch
      %50 = sbr.rel (0) target = $region25
    $region24: #{tpu_custom_call.1} parent=1 // pred_region
      %51 = dma.done [#allocation6], 1024
    $region25: #{tpu_custom_call.1} parent=1 // pred_fallthru
      _
    %v52 = vld [vmem:[#allocation5] sm:$0xff]
    %v53 = vld [vmem:[#allocation7] sm:$0xff]
    %v54 = vld [vmem:[#allocation7 + $0x8] sm:$0xff]
    %v55 = vld [vmem:[#allocation7 + $0x10] sm:$0xff]
    %v56 = vld [vmem:[#allocation7 + $0x18] sm:$0xff]
    %v57 = vld [vmem:[#allocation7 + $0x20] sm:$0xff]
    %v58 = vld [vmem:[#allocation7 + $0x28] sm:$0xff]
    %v59 = vld [vmem:[#allocation7 + $0x30] sm:$0xff]
    %v60 = vld [vmem:[#allocation7 + $0x38] sm:$0xff]
    %vm61 = vcmask 261120
    %v63 = vsel %vm61, %v52, 0
    %65 = vmatprep.subr.mxu0 %v54
    %66 = vmatpush1.msra.mxu0 %v53
    %67 = vmatprep.subr.mxu0 %v56
    %68 = vmatpush1.msra.mxu0 %v55
    %69 = vmatprep.subr.mxu0 %v58
    %70 = vmatpush1.msra.mxu0 %v57
    %71 = vmatprep.subr.mxu0 %v60
    %72 = vmatpush1.msra.mxu0 %v59
    %73 = vmatprep.subr.mxu0 0.0
    %74 = vmatpush1.msra.mxu0 0.0
    %75 = vmatprep.subr.mxu0 0.0
    %76 = vmatpush1.msra.mxu0 0.0
    %77 = vmatprep.subr.mxu0 0.0
    %78 = vmatpush1.msra.mxu0 0.0
    %79 = vmatprep.subr.mxu0 0.0
    %80 = vmatpush1.msra.mxu0 0.0
    %81 = vmatprep.subr.mxu0 0.0
    %82 = vmatpush1.msra.mxu0 0.0
    %83 = vmatprep.subr.mxu0 0.0
    %84 = vmatpush1.msra.mxu0 0.0
    %85 = vmatprep.subr.mxu0 0.0
    %86 = vmatpush1.msra.mxu0 0.0
    %87 = vmatprep.subr.mxu0 0.0
    %88 = vmatpush1.msra.mxu0 0.0
    %89 = vmatprep.subr.mxu0 0.0
    %90 = vmatpush1.msra.mxu0 0.0
    %91 = vmatprep.subr.mxu0 0.0
    %92 = vmatpush1.msra.mxu0 0.0
    %93 = vmatprep.subr.mxu0 0.0
    %94 = vmatpush1.msra.mxu0 0.0
    %95 = vmatprep.subr.mxu0 0.0
    %96 = vmatpush1.msra.mxu0 0.0
    %97 = vmatprep.subr.mxu0 0.0
    %98 = vmatpush1.msra.mxu0 0.0
    %99 = vmatprep.subr.mxu0 0.0
    %100 = vmatpush1.msra.mxu0 0.0
    %101 = vmatprep.subr.mxu0 0.0
    %102 = vmatpush1.msra.mxu0 0.0
    %103 = vmatprep.subr.mxu0 0.0
    %104 = vmatpush1.msra.mxu0 0.0
    %105 = vmatprep.subr.mxu0 0.0
    %106 = vmatpush1.msra.mxu0 0.0
    %107 = vmatprep.subr.mxu0 0.0
    %108 = vmatpush1.msra.mxu0 0.0
    %109 = vmatprep.subr.mxu0 0.0
    %110 = vmatpush1.msra.mxu0 0.0
    %111 = vmatprep.subr.mxu0 0.0
    %112 = vmatpush1.msra.mxu0 0.0
    %113 = vmatprep.subr.mxu0 0.0
    %114 = vmatpush1.msra.mxu0 0.0
    %115 = vmatprep.subr.mxu0 0.0
    %116 = vmatpush1.msra.mxu0 0.0
    %117 = vmatprep.subr.mxu0 0.0
    %118 = vmatpush1.msra.mxu0 0.0
    %119 = vmatprep.subr.mxu0 0.0
    %120 = vmatpush1.msra.mxu0 0.0
    %121 = vmatprep.subr.mxu0 0.0
    %122 = vmatpush1.msra.mxu0 0.0
    %123 = vmatprep.subr.mxu0 0.0
    %124 = vmatpush1.msra.mxu0 0.0
    %125 = vmatprep.subr.mxu0 0.0
    %126 = vmatpush1.msra.mxu0 0.0
    %127 = vmatprep.subr.mxu0 0.0
    %128 = vmatpush1.msra.mxu0 0.0
    %129 = vmatprep.mubr.f32.mxu0 0.0
    %130 = vmatmul.mubr.f32.gmra.mrb[0].mxu0 %v63
    %v131 = vpop.f32.mrb[0].mxu0
    %v132 = vadd.f32 0.0, %v131
    %v133 = vpop.f32.mrb[0].mxu0
    %v134 = vadd.f32 0.0, %v133
    %135 = vdwg.mxu0
    %v136 = vmax.f32 %v132, 0.0
    %v137 = vand.u32 2147483647, %v132
    %v138 = vsub.f32 0.0, %v137
    %v139 = vmul.f32 %v138, 1.442695
    %v140 = vpow.pop %v139
    %v141 = vadd.f32 %v140, 1.0
    %v142 = vlog2.pop %v141
    %v143 = vmul.f32 %v142, 0.6931472
    %v144 = vmul.f32 -0.5, %v140
    %v145 = vadd.f32 %v144, 1.0
    %v146 = vmul.f32 %v145, %v140
    %v147 = vand.u32 2147483647, %v140
    %vm148 = vcmp.lt.f32.partialorder %v147, 0.0004427343
    %v149 = vsel %vm148, %v146, %v143
    %v150 = vadd.f32 %v136, %v149
    %v151 = vld [vmem:[#allocation2] sm:$0xff]
    %v152 = vmul.f32 %v150, %v151
    %v153 = vadd.f32 %v152, %v134
    %154 = vst [vmem:[#allocation8] sm:$0xff] %v153
    // Predicated region
    $region26: #{tpu_custom_call.1} parent=1 // pred_check
      _
    $region27: #{tpu_custom_call.1} parent=1 // pred_check_branch
      %156 = sbr.rel (0) target = $region29
    $region28: #{tpu_custom_call.1} parent=1 // pred_region
      %s158 = ssub.s32 128, 128
      %159 = vsyncadd [#allocation4], %s158
      %s161 = sshll.u32 [#allocation8], 4
      %s162 = int_to_ptr.vmem [resolvable:$true] %s161
      %164 = dma.vmem_to_hbm [thread:$0]  %s162, 128, %s3, [#allocation4]
    $region29: #{tpu_custom_call.1} parent=1 // pred_fallthru
      _
    // Predicated region
    $region30: #{tpu_custom_call.1} parent=1 // pred_check
      _
    $region31: #{tpu_custom_call.1} parent=1 // pred_check_branch
      %166 = sbr.rel (0) target = $region33
    $region32: #{tpu_custom_call.1} parent=1 // pred_region
      %167 = dma.done [#allocation4], 128
    $region33: #{tpu_custom_call.1} parent=1 // pred_fallthru
      _
    %168 = vsyncpa [#allocation3], 1
    %169 = vsyncpa [#allocation6], 1
    %170 = vsyncpa [#allocation4], 1

</llo_original>
